<compile_context>
chip_gen: v5e
topology: v5e:2x2
jax: 0.10.0
libtpu: 0.0.40
codegen_flags: <defaults>
</compile_context>

<pallas_src>
import jax
import jax.numpy as jnp
from jax.experimental import pallas as pl
from jax.experimental.pallas import tpu as pltpu


# --------------------------------------------------------------------------
# Kernel
# --------------------------------------------------------------------------
def critic_kernel(x_ref, a_ref, w1x_ref, w1a_ref, b1_ref, w2_ref, b2_ref,
                  w3r_ref, b3_ref, q_ref):
    cdt = w1x_ref.dtype                                   # matmul operand dtype

    # fc1, split across the concat boundary: two MXU pushes (K<=obs+goal and
    # K<=action) accumulated in f32.  This replaces the wrapper-side
    # concat+cast (a full extra XLA launch + HBM round trip).
    h1 = jnp.dot(x_ref[...].astype(cdt), w1x_ref[...],
                 preferred_element_type=jnp.float32)
    h1 = h1 + jnp.dot(a_ref[...].astype(cdt), w1a_ref[...],
                      preferred_element_type=jnp.float32)
    h1 = jnp.maximum(h1 + b1_ref[...], 0.0)               # f32 bias + ReLU

    # fc2
    h2 = jnp.dot(h1.astype(w2_ref.dtype), w2_ref[...],
                 preferred_element_type=jnp.float32)
    h2 = jnp.maximum(h2 + b2_ref[...], 0.0)               # f32 [bm, 256]

    # q_out (N = 1): VPU multiply + XLU lane reduction instead of a 1-lane
    # MXU matmul.  b3 is a scalar read from SMEM (no padded VMEM tile).
    q_ref[...] = (jnp.sum(h2 * w3r_ref[...], axis=-1, keepdims=True)
                  + b3_ref[0])


# --------------------------------------------------------------------------
# Wrapper
# --------------------------------------------------------------------------
def _pick_block_rows(batch: int) -> int:
    """Fewer, bigger blocks (amortize ~0.35us/step), but guarantee >=2 blocks
    once B >= 256 so v7x's second TensorCore is used.  Partial last blocks
    are fine: Pallas masks the ragged output write."""
    if batch < 256:
        return batch                                   # single block
    n_blocks = max(2, pl.cdiv(batch, 512))             # ~512 rows per block
    bm = pl.cdiv(batch, n_blocks)
    bm = ((bm + 7) // 8) * 8                           # sublane-aligned tile
    return min(bm, batch)


def critic_forward(x, actions, prepped_params, *, block_rows=None):
    """x: [B, obs+goal] f32, actions: [B, action] f32 -> q: [B, 1] f32."""
    w1x, w1a, b1, w2, b2, w3row, b3 = prepped_params
    B, Kx = x.shape
    Ka = actions.shape[1]
    H = w2.shape[0]
    assert w1x.shape == (Kx, H) and w1a.shape == (Ka, H)

    bm = block_rows if block_rows is not None else _pick_block_rows(B)
    bm = min(bm, B)
    grid = (pl.cdiv(B, bm),)

    def resident(shape):
        # Constant block index => DMA'd once, stays VMEM-resident across steps.
        return pl.BlockSpec(shape, lambda i, n=len(shape): (0,) * n)

    # Advisory cost hint so XLA schedules neighboring ops around this call.
    flops = 2 * B * (Kx * H + Ka * H + H * H + H)
    bytes_accessed = (x.size * x.dtype.itemsize
                      + actions.size * actions.dtype.itemsize
                      + sum(int(p.size) * p.dtype.itemsize
                            for p in prepped_params)
                      + B * 4)
    cost = pl.CostEstimate(flops=flops, transcendentals=0,
                           bytes_accessed=bytes_accessed)

    return pl.pallas_call(
        critic_kernel,
        out_shape=jax.ShapeDtypeStruct((B, 1), jnp.float32),
        grid=grid,
        in_specs=[
            pl.BlockSpec((bm, Kx), lambda i: (i, 0)),   # obs+goal: pipelined
            pl.BlockSpec((bm, Ka), lambda i: (i, 0)),   # actions:  pipelined
            resident((Kx, H)),                          # W1 (obs/goal rows)
            resident((Ka, H)),                          # W1 (action rows, scaled)
            resident((1, H)),                           # b1 (f32)
            resident((H, H)),                           # W2
            resident((1, H)),                           # b2 (f32)
            resident((1, H)),                           # W3 as a [1, 256] row
            pl.BlockSpec(memory_space=pltpu.MemorySpace.SMEM),  # b3 scalar
        ],
        # NOTE: last-dim-1 output lowers to masked stores; at B*4 bytes this
        # is negligible.  Fuse q into a larger downstream slab if it ever
        # shows up as store-bound.
        out_specs=pl.BlockSpec((bm, 1), lambda i: (i, 0)),
        compiler_params=pltpu.CompilerParams(
            dimension_semantics=("parallel",)),         # v7x: shard batch on 2 TCs
        cost_estimate=cost,
    )(x, actions, w1x, w1a, b1, w2, b2, w3row, b3)


# --------------------------------------------------------------------------
# Parameters
# --------------------------------------------------------------------------
def init_params(key, obs, goal, action, hidden=256):
    """Raw params in x @ W + b layout (PyTorch-Linear-like uniform fan-in)."""
    in_dim = obs + goal + action
    ks = jax.random.split(key, 6)

    def lin_init(kw, kb, fan_in, fan_out):
        bound = 1.0 / jnp.sqrt(jnp.float32(fan_in))
        w = jax.random.uniform(kw, (fan_in, fan_out), jnp.float32, -bound, bound)
        b = jax.random.uniform(kb, (1, fan_out), jnp.float32, -bound, bound)
        return w, b

    w1, b1 = lin_init(ks[0], ks[1], in_dim, hidden)
    w2, b2 = lin_init(ks[2], ks[3], hidden, hidden)
    w3, b3 = lin_init(ks[4], ks[5], hidden, 1)
    return (w1, b1, w2, b2, w3, b3)


def prepare_params(raw_params, max_action, action_dim,
                   compute_dtype=jnp.bfloat16):
    """One-time (off the per-call path) transform of raw params for the kernel:
       * split W1 at the concat boundary (obs+goal rows | action rows),
       * fold 1/max_action into the action sub-weight,
       * cast matmul operands to `compute_dtype` (biases / W3-row stay f32),
       * reshape W3 [H, 1] into a [1, H] row for the VPU/XLU reduce,
       * b3 as a length-1 f32 vector (read from SMEM in the kernel).
       NOTE: folding 1/max_action then casting to bf16 rounds differently than
       dividing actions first; exact for power-of-two max_action, otherwise
       within bf16 tolerance."""
    w1, b1, w2, b2, w3, b3 = raw_params
    in_dim = w1.shape[0]
    w1x = w1[: in_dim - action_dim, :]
    w1a = w1[in_dim - action_dim:, :] * (1.0 / float(max_action))
    return (w1x.astype(compute_dtype),
            w1a.astype(compute_dtype),
            b1.astype(jnp.float32),
            w2.astype(compute_dtype),
            b2.astype(jnp.float32),
            w3.reshape(1, -1).astype(jnp.float32),
            b3.reshape(1).astype(jnp.float32))


# --------------------------------------------------------------------------
# Pure-JAX reference (original module semantics)
# --------------------------------------------------------------------------
def critic_ref(x, actions, raw_params, max_action):
    w1, b1, w2, b2, w3, b3 = raw_params
    xc = jnp.concatenate([x, actions / max_action], axis=1)
    h1 = jnp.maximum(xc @ w1 + b1, 0.0)
    h2 = jnp.maximum(h1 @ w2 + b2, 0.0)
    return h2 @ w3 + b3


if __name__ == "__main__":
    # Small env: obs=10, goal=3, action=4, action_max=2.0, batch=8
    obs, goal, action = 10, 3, 4
    max_action = 2.0
    B = 8

    key = jax.random.PRNGKey(0)
    kx, ka, kp = jax.random.split(key, 3)

    x = jax.random.normal(kx, (B, obs + goal), jnp.float32)
    actions = jax.random.uniform(ka, (B, action), jnp.float32,
                                 -max_action, max_action)
    raw_params = init_params(kp, obs, goal, action)
    q_expected = critic_ref(x, actions, raw_params, max_action)

    # (1) f32-operand path: tight parity check of the kernel structure
    #     (split fc1, folded max_action, SMEM b3, VPU/XLU q_out).
    p32 = prepare_params(raw_params, max_action, action,
                         compute_dtype=jnp.float32)
    q32 = jax.block_until_ready(critic_forward(x, actions, p32))
    assert q32.shape == (B, 1)
    assert jnp.allclose(q32, q_expected, atol=1e-4, rtol=1e-4), \
        "f32 kernel mismatch vs reference"

    # (2) bf16-operand path (production config): f32 accumulation, so only a
    #     small quantization drift vs. the f32 reference is expected.
    pbf = prepare_params(raw_params, max_action, action,
                         compute_dtype=jnp.bfloat16)
    qbf = jax.block_until_ready(critic_forward(x, actions, pbf))
    assert qbf.shape == (B, 1)
    assert jnp.allclose(qbf, q_expected, atol=5e-2, rtol=5e-2), \
        "bf16 kernel drifted too far from reference"

    print("KERNEL_OK")
</pallas_src>

<mosaic_0001>
module attributes {stable_mosaic.version = 11 : i64} {
  func.func @critic_kernel(%arg0: i32, %arg1: memref<8x13xf32, #tpu.memory_space<vmem>>, %arg2: memref<8x4xf32, #tpu.memory_space<vmem>>, %arg3: memref<13x256xf32, #tpu.memory_space<vmem>>, %arg4: memref<4x256xf32, #tpu.memory_space<vmem>>, %arg5: memref<1x256xf32, #tpu.memory_space<vmem>>, %arg6: memref<256x256xf32, #tpu.memory_space<vmem>>, %arg7: memref<1x256xf32, #tpu.memory_space<vmem>>, %arg8: memref<1x256xf32, #tpu.memory_space<vmem>>, %arg9: memref<1xf32, #tpu.memory_space<smem>>, %arg10: memref<8x1xf32, #tpu.memory_space<vmem>>) attributes {dimension_semantics = [#tpu.dimension_semantics<parallel>], iteration_bounds = array<i64: 1>, scalar_prefetch = 0 : i64, scratch_operands = 0 : i64, tpu.core_type = #tpu.core_type<tc>, window_params = [{transform_indices = @transform_0, window_bounds = array<i64: 8, 13>}, {transform_indices = @transform_1, window_bounds = array<i64: 8, 4>}, {pipeline_mode = #tpu.pipeline_mode<synchronous>, transform_indices = @transform_2, window_bounds = array<i64: 13, 256>}, {pipeline_mode = #tpu.pipeline_mode<synchronous>, transform_indices = @transform_3, window_bounds = array<i64: 4, 256>}, {pipeline_mode = #tpu.pipeline_mode<synchronous>, transform_indices = @transform_4, window_bounds = array<i64: 1, 256>}, {pipeline_mode = #tpu.pipeline_mode<synchronous>, transform_indices = @transform_5, window_bounds = array<i64: 256, 256>}, {pipeline_mode = #tpu.pipeline_mode<synchronous>, transform_indices = @transform_6, window_bounds = array<i64: 1, 256>}, {pipeline_mode = #tpu.pipeline_mode<synchronous>, transform_indices = @transform_7, window_bounds = array<i64: 1, 256>}, {transform_indices = @transform_8, window_bounds = array<i64: 1>}, {transform_indices = @transform_9, window_bounds = array<i64: 8, 1>}]} {
    %c0 = arith.constant 0 : index
    %c0_0 = arith.constant 0 : index
    %0 = vector.load %arg1[%c0, %c0_0] : memref<8x13xf32, #tpu.memory_space<vmem>>, vector<8x13xf32>
    %c0_1 = arith.constant 0 : index
    %c0_2 = arith.constant 0 : index
    %1 = vector.load %arg3[%c0_1, %c0_2] : memref<13x256xf32, #tpu.memory_space<vmem>>, vector<13x256xf32>
    %cst = arith.constant dense<0.000000e+00> : vector<8x256xf32>
    %2 = tpu.matmul %0, %1, %cst {dimension_numbers = #tpu.dot_dimension_numbers<[1], [0], [0], [1], [0, 0, 1, 1], [], []>} : vector<8x13xf32>, vector<13x256xf32>, vector<8x256xf32> -> vector<8x256xf32>
    %c0_3 = arith.constant 0 : index
    %c0_4 = arith.constant 0 : index
    %3 = vector.load %arg2[%c0_3, %c0_4] : memref<8x4xf32, #tpu.memory_space<vmem>>, vector<8x4xf32>
    %c0_5 = arith.constant 0 : index
    %c0_6 = arith.constant 0 : index
    %4 = vector.load %arg4[%c0_5, %c0_6] : memref<4x256xf32, #tpu.memory_space<vmem>>, vector<4x256xf32>
    %cst_7 = arith.constant dense<0.000000e+00> : vector<8x256xf32>
    %5 = tpu.matmul %3, %4, %cst_7 {dimension_numbers = #tpu.dot_dimension_numbers<[1], [0], [0], [1], [0, 0, 1, 1], [], []>} : vector<8x4xf32>, vector<4x256xf32>, vector<8x256xf32> -> vector<8x256xf32>
    %6 = arith.addf %2, %5 : vector<8x256xf32>
    %c0_8 = arith.constant 0 : index
    %c0_9 = arith.constant 0 : index
    %7 = vector.load %arg5[%c0_8, %c0_9] : memref<1x256xf32, #tpu.memory_space<vmem>>, vector<1x256xf32>
    %8 = vector.broadcast %7 : vector<1x256xf32> to vector<8x256xf32>
    %9 = arith.addf %6, %8 : vector<8x256xf32>
    %cst_10 = arith.constant 0.000000e+00 : f32
    %10 = vector.broadcast %cst_10 : f32 to vector<8x256xf32>
    %11 = arith.maximumf %9, %10 : vector<8x256xf32>
    %c0_11 = arith.constant 0 : index
    %c0_12 = arith.constant 0 : index
    %12 = vector.load %arg6[%c0_11, %c0_12] : memref<256x256xf32, #tpu.memory_space<vmem>>, vector<256x256xf32>
    %cst_13 = arith.constant dense<0.000000e+00> : vector<8x256xf32>
    %13 = tpu.matmul %11, %12, %cst_13 {dimension_numbers = #tpu.dot_dimension_numbers<[1], [0], [0], [1], [0, 0, 1, 1], [], []>} : vector<8x256xf32>, vector<256x256xf32>, vector<8x256xf32> -> vector<8x256xf32>
    %c0_14 = arith.constant 0 : index
    %c0_15 = arith.constant 0 : index
    %14 = vector.load %arg7[%c0_14, %c0_15] : memref<1x256xf32, #tpu.memory_space<vmem>>, vector<1x256xf32>
    %15 = vector.broadcast %14 : vector<1x256xf32> to vector<8x256xf32>
    %16 = arith.addf %13, %15 : vector<8x256xf32>
    %cst_16 = arith.constant 0.000000e+00 : f32
    %17 = vector.broadcast %cst_16 : f32 to vector<8x256xf32>
    %18 = arith.maximumf %16, %17 : vector<8x256xf32>
    %c0_17 = arith.constant 0 : index
    %c0_18 = arith.constant 0 : index
    %19 = vector.load %arg8[%c0_17, %c0_18] : memref<1x256xf32, #tpu.memory_space<vmem>>, vector<1x256xf32>
    %20 = vector.broadcast %19 : vector<1x256xf32> to vector<8x256xf32>
    %21 = arith.mulf %18, %20 : vector<8x256xf32>
    %cst_19 = arith.constant dense<0.000000e+00> : vector<8xf32>
    %22 = vector.multi_reduction <add>, %21, %cst_19 [1] : vector<8x256xf32> to vector<8xf32>
    %23 = vector.shape_cast %22 : vector<8xf32> to vector<8x1xf32>
    %c0_20 = arith.constant 0 : index
    %24 = memref.load %arg9[%c0_20] : memref<1xf32, #tpu.memory_space<smem>>
    %25 = vector.broadcast %24 : f32 to vector<8x1xf32>
    %26 = arith.addf %23, %25 : vector<8x1xf32>
    %c0_21 = arith.constant 0 : index
    %c0_22 = arith.constant 0 : index
    %27 = vector.load %arg10[%c0_21, %c0_22] : memref<8x1xf32, #tpu.memory_space<vmem>>, vector<8x1xf32>
    tpu.vector_store %arg10[%c0_21, %c0_22], %26 {strides = array<i32>} : memref<8x1xf32, #tpu.memory_space<vmem>>, vector<8x1xf32>,
    return
  }
  func.func @transform_0(%arg0: i32) -> (i32, i32) {
    %c0_i32 = arith.constant 0 : i32
    %c0_i32_0 = arith.constant 0 : i32
    return %arg0, %c0_i32 : i32, i32
  }
  func.func @transform_1(%arg0: i32) -> (i32, i32) {
    %c0_i32 = arith.constant 0 : i32
    %c0_i32_0 = arith.constant 0 : i32
    return %arg0, %c0_i32 : i32, i32
  }
  func.func @transform_2(%arg0: i32) -> (i32, i32) {
    %c0_i32 = arith.constant 0 : i32
    %c0_i32_0 = arith.constant 0 : i32
    %c0_i32_1 = arith.constant 0 : i32
    return %c0_i32, %c0_i32_0 : i32, i32
  }
  func.func @transform_3(%arg0: i32) -> (i32, i32) {
    %c0_i32 = arith.constant 0 : i32
    %c0_i32_0 = arith.constant 0 : i32
    %c0_i32_1 = arith.constant 0 : i32
    return %c0_i32, %c0_i32_0 : i32, i32
  }
  func.func @transform_4(%arg0: i32) -> (i32, i32) {
    %c0_i32 = arith.constant 0 : i32
    %c0_i32_0 = arith.constant 0 : i32
    %c0_i32_1 = arith.constant 0 : i32
    return %c0_i32, %c0_i32_0 : i32, i32
  }
  func.func @transform_5(%arg0: i32) -> (i32, i32) {
    %c0_i32 = arith.constant 0 : i32
    %c0_i32_0 = arith.constant 0 : i32
    %c0_i32_1 = arith.constant 0 : i32
    return %c0_i32, %c0_i32_0 : i32, i32
  }
  func.func @transform_6(%arg0: i32) -> (i32, i32) {
    %c0_i32 = arith.constant 0 : i32
    %c0_i32_0 = arith.constant 0 : i32
    %c0_i32_1 = arith.constant 0 : i32
    return %c0_i32, %c0_i32_0 : i32, i32
  }
  func.func @transform_7(%arg0: i32) -> (i32, i32) {
    %c0_i32 = arith.constant 0 : i32
    %c0_i32_0 = arith.constant 0 : i32
    %c0_i32_1 = arith.constant 0 : i32
    return %c0_i32, %c0_i32_0 : i32, i32
  }
  func.func @transform_8(%arg0: i32) -> i32 {
    %c0_i32 = arith.constant 0 : i32
    %c0_i32_0 = arith.constant 0 : i32
    return %c0_i32 : i32
  }
  func.func @transform_9(%arg0: i32) -> (i32, i32) {
    %c0_i32 = arith.constant 0 : i32
    %c0_i32_0 = arith.constant 0 : i32
    return %arg0, %c0_i32 : i32, i32
  }
}

</mosaic_0001>

<llo_original>
// kernel: tpu_custom_call.1
$region0: #{tpu_custom_call.1}
  #allocation0 [shape = 'u32[]', space=smem, size = 0x4, offset = 0x4, fixed_abs, tag = 'smem constant byte address 0x4 - core index']
  #allocation1 [shape = 'u32[72,128]{1,0:T(1,128)}', space=vmem, size = 0x9000, scoped, tag = 'internal scratch']
  #allocation2 [shape = 'f32[1]{0:T(128)S(6)}', space=smem, size = 0x200, scoped, tag = 'scoped memory for tpu_custom_call.1']
  %s0 = inlined_call_operand.vmem [shape: f32[8,13], index: 0, kind: input, shape index: {}]
  %s1 = inlined_call_operand.vmem [shape: f32[8,4], index: 1, kind: input, shape index: {}]
  %s2 = inlined_call_operand.hbm [shape: f32[13,256], index: 2, kind: input, shape index: {}]
  %s3 = inlined_call_operand.vmem [shape: f32[4,256], index: 3, kind: input, shape index: {}]
  %s4 = inlined_call_operand.hbm [shape: f32[1,256], index: 4, kind: input, shape index: {}]
  %s5 = inlined_call_operand.hbm [shape: f32[256,256], index: 5, kind: input, shape index: {}]
  %s6 = inlined_call_operand.vmem [shape: f32[1,256], index: 6, kind: input, shape index: {}]
  %s7 = inlined_call_operand.vmem [shape: f32[1,256], index: 7, kind: input, shape index: {}]
  %s8 = inlined_call_operand.<no memory space> [shape: f32[1], index: 8, kind: input, shape index: {}]
  %s9 = inlined_call_operand.vmem [shape: f32[8,1], index: 9, kind: output, shape index: {}]
  %s10 = sld [smem:[#allocation0]]
  $region58: #{tpu_custom_call.1} parent=0
    _
  %s12 = ssub.s32 1, %s10
  %s13 = scalar_select 0, %s12, %s10
  %14 = sst [smem:[#allocation2]] %s8
  $region1: #{tpu_custom_call.1} parent=0
    #allocation3 [shape = 'u8[16384]{0}', space=vmem, size = 0x4000, scoped, tag = 'input window, operand 2, single buffered']
    #allocation4 [shape = 's32[1]{0}', space=sflag, size = 0x4, scoped, tag = 'scoped memory for tpu_custom_call.1']
    #allocation5 [shape = 'u8[1024]{0}', space=vmem, size = 0x400, scoped, tag = 'input window, operand 4, single buffered']
    #allocation6 [shape = 's32[1]{0}', space=sflag, size = 0x4, scoped, tag = 'scoped memory for tpu_custom_call.1']
    #allocation7 [shape = 'u8[262144]{0}', space=vmem, size = 0x40000, scoped, tag = 'input window, operand 5, single buffered']
    %15 = vsyncpa [#allocation4], 0
    %16 = vsyncpa [#allocation6], 0
    // Predicated region
    $region2: #{tpu_custom_call.1} parent=1 // pred_check
      _
    $region3: #{tpu_custom_call.1} parent=1 // pred_check_branch
      %18 = sbr.rel (0) target = $region5
    $region4: #{tpu_custom_call.1} parent=1 // pred_region
      _
    $region5: #{tpu_custom_call.1} parent=1 // pred_fallthru
      _
    // Predicated region
    $region6: #{tpu_custom_call.1} parent=1 // pred_check
      _
    $region7: #{tpu_custom_call.1} parent=1 // pred_check_branch
      %20 = sbr.rel (0) target = $region9
    $region8: #{tpu_custom_call.1} parent=1 // pred_region
      _
    $region9: #{tpu_custom_call.1} parent=1 // pred_fallthru
      _
    // Predicated region
    $region10: #{tpu_custom_call.1} parent=1 // pred_check
      _
    $region11: #{tpu_custom_call.1} parent=1 // pred_check_branch
      %22 = sbr.rel (0) target = $region13
    $region12: #{tpu_custom_call.1} parent=1 // pred_region
      %24 = vsyncadd [#allocation4], 0
      %s25 = sshll.u32 %s2, 4
      %s26 = int_to_ptr.hbm [resolvable:$true] %s25
      %s27 = sshll.u32 [#allocation3], 4
      %s28 = int_to_ptr.vmem [resolvable:$true] %s27
      %33 = dma.hbm_to_vmem [thread:$0]  %s26, 512, %s28, [#allocation4], 256, 256, 16
    $region13: #{tpu_custom_call.1} parent=1 // pred_fallthru
      _
    // Predicated region
    $region14: #{tpu_custom_call.1} parent=1 // pred_check
      _
    $region15: #{tpu_custom_call.1} parent=1 // pred_check_branch
      %35 = sbr.rel (0) target = $region17
    $region16: #{tpu_custom_call.1} parent=1 // pred_region
      _
    $region17: #{tpu_custom_call.1} parent=1 // pred_fallthru
      _
    // Predicated region
    $region18: #{tpu_custom_call.1} parent=1 // pred_check
      _
    $region19: #{tpu_custom_call.1} parent=1 // pred_check_branch
      %37 = sbr.rel (0) target = $region21
    $region20: #{tpu_custom_call.1} parent=1 // pred_region
      %39 = vsyncadd [#allocation6], 0
      %s41 = sshll.u32 %s4, 4
      %s42 = int_to_ptr.hbm [resolvable:$true] %s41
      %s43 = sshll.u32 [#allocation5], 4
      %s44 = int_to_ptr.vmem [resolvable:$true] %s43
      %46 = dma.hbm_to_vmem [thread:$0]  %s42, 32, %s44, [#allocation6]
    $region21: #{tpu_custom_call.1} parent=1 // pred_fallthru
      _
    // Predicated region
    $region22: #{tpu_custom_call.1} parent=1 // pred_check
      _
    $region23: #{tpu_custom_call.1} parent=1 // pred_check_branch
      %48 = sbr.rel (0) target = $region25
    $region24: #{tpu_custom_call.1} parent=1 // pred_region
      %50 = vsyncadd [#allocation6], 0
      %s51 = sshll.u32 %s5, 4
      %s52 = int_to_ptr.hbm [resolvable:$true] %s51
      %s53 = sshll.u32 [#allocation7], 4
      %s54 = int_to_ptr.vmem [resolvable:$true] %s53
      %59 = dma.hbm_to_vmem [thread:$0]  %s52, 8192, %s54, [#allocation6], 256, 256, 16
    $region25: #{tpu_custom_call.1} parent=1 // pred_fallthru
      _
    // Predicated region
    $region26: #{tpu_custom_call.1} parent=1 // pred_check
      _
    $region27: #{tpu_custom_call.1} parent=1 // pred_check_branch
      %61 = sbr.rel (0) target = $region29
    $region28: #{tpu_custom_call.1} parent=1 // pred_region
      _
    $region29: #{tpu_custom_call.1} parent=1 // pred_fallthru
      _
    // Predicated region
    $region30: #{tpu_custom_call.1} parent=1 // pred_check
      _
    $region31: #{tpu_custom_call.1} parent=1 // pred_check_branch
      %63 = sbr.rel (0) target = $region33
    $region32: #{tpu_custom_call.1} parent=1 // pred_region
      _
    $region33: #{tpu_custom_call.1} parent=1 // pred_fallthru
      _
    // Predicated region
    $region34: #{tpu_custom_call.1} parent=1 // pred_check
      _
    $region35: #{tpu_custom_call.1} parent=1 // pred_check_branch
      %65 = sbr.rel (0) target = $region37
    $region36: #{tpu_custom_call.1} parent=1 // pred_region
      _
    $region37: #{tpu_custom_call.1} parent=1 // pred_fallthru
      _
    // Predicated region
    $region38: #{tpu_custom_call.1} parent=1 // pred_check
      _
    $region39: #{tpu_custom_call.1} parent=1 // pred_check_branch
      %67 = sbr.rel (0) target = $region41
    $region40: #{tpu_custom_call.1} parent=1 // pred_region
      %69 = dma.done [#allocation4], 512
    $region41: #{tpu_custom_call.1} parent=1 // pred_fallthru
      _
    // Predicated region
    $region42: #{tpu_custom_call.1} parent=1 // pred_check
      _
    $region43: #{tpu_custom_call.1} parent=1 // pred_check_branch
      %71 = sbr.rel (0) target = $region45
    $region44: #{tpu_custom_call.1} parent=1 // pred_region
      %73 = dma.done [#allocation6], 32
    $region45: #{tpu_custom_call.1} parent=1 // pred_fallthru
      _
    // Predicated region
    $region46: #{tpu_custom_call.1} parent=1 // pred_check
      _
    $region47: #{tpu_custom_call.1} parent=1 // pred_check_branch
      %75 = sbr.rel (0) target = $region49
    $region48: #{tpu_custom_call.1} parent=1 // pred_region
      %77 = dma.done [#allocation6], 8192
    $region49: #{tpu_custom_call.1} parent=1 // pred_fallthru
      _
    %v78 = vld [vmem:[%s0] sm:$0xff]
    %v79 = vld [vmem:[#allocation3] sm:$0xff]
    %v80 = vld [vmem:[#allocation3 + $0x8] sm:$0xff]
    %v81 = vld [vmem:[#allocation3 + $0x10] sm:$0x1f]
    %v82 = vld [vmem:[#allocation3 + $0x18] sm:$0x1f]
    %v83 = vld [vmem:[%s1] sm:$0xff]
    %v84 = vld [vmem:[%s3] sm:$0xff]
    %86 = vst [vmem:[#allocation1] ss:$2 sm:$0xff] %v84
    %v87 = vld.sshfl [vmem:[#allocation1] sm:$0xff pattern:$0x75316420]
    %v88 = vld.sshfl [vmem:[#allocation1 + $0x8] sm:$0xff pattern:$0x75316420]
    %vm89 = vcmask 31744
    %v91 = vsel %vm89, %v83, 0
    %vm93 = vcmask 1043456
    %v94 = vsel %vm93, %v87, 0
    %v96 = vsel %vm93, %v88, 0
    %98 = vmatpush.msra.mxu0 0.0
    %99 = vmatpush.msra.mxu0 0.0
    %100 = vmatpush.msra.mxu0 0.0
    %101 = vmatpush.msra.mxu0 0.0
    %102 = vmatpush.msra.mxu0 0.0
    %103 = vmatpush.msra.mxu0 0.0
    %104 = vmatpush.msra.mxu0 0.0
    %105 = vmatpush.msra.mxu0 0.0
    %106 = vmatpush.msra.mxu0 0.0
    %107 = vmatpush.msra.mxu0 0.0
    %108 = vmatpush.msra.mxu0 0.0
    %109 = vmatpush.msra.mxu0 0.0
    %110 = vmatpush.msra.mxu0 0.0
    %111 = vmatpush.msra.mxu0 0.0
    %112 = vmatpush.msra.mxu0 0.0
    %113 = vmatpush.msra.mxu0 %v94
    %114 = vmatmul.f32.gmra.mxu0 %v91
    %v115 = vpop.f32.mrf.mxu0
    %v116 = vadd.f32 0.0, %v115
    %117 = vdwg.mxu0
    %118 = vmatpush.msra.mxu0 0.0
    %119 = vmatpush.msra.mxu0 0.0
    %120 = vmatpush.msra.mxu0 0.0
    %121 = vmatpush.msra.mxu0 0.0
    %122 = vmatpush.msra.mxu0 0.0
    %123 = vmatpush.msra.mxu0 0.0
    %124 = vmatpush.msra.mxu0 0.0
    %125 = vmatpush.msra.mxu0 0.0
    %126 = vmatpush.msra.mxu0 0.0
    %127 = vmatpush.msra.mxu0 0.0
    %128 = vmatpush.msra.mxu0 0.0
    %129 = vmatpush.msra.mxu0 0.0
    %130 = vmatpush.msra.mxu0 0.0
    %131 = vmatpush.msra.mxu0 0.0
    %132 = vmatpush.msra.mxu0 0.0
    %133 = vmatpush.msra.mxu0 %v96
    %134 = vmatmul.f32.gmra.mxu0 %v91
    %v135 = vpop.f32.mrf.mxu0
    %v136 = vadd.f32 0.0, %v135
    %137 = vdwg.mxu0
    %vm138 = vcmask 105472
    %v140 = vsel %vm138, %v78, 0
    %vm142 = vcmask 1044480
    %v144 = vsel %vm142, %v81, 0
    %v147 = vsel %vm142, %v82, 0
    %149 = vmatpush.msra.mxu0 0.0
    %150 = vmatpush.msra.mxu0 0.0
    %151 = vmatpush.msra.mxu0 0.0
    %152 = vmatpush.msra.mxu0 0.0
    %153 = vmatpush.msra.mxu0 0.0
    %154 = vmatpush.msra.mxu0 0.0
    %155 = vmatpush.msra.mxu0 0.0
    %156 = vmatpush.msra.mxu0 0.0
    %157 = vmatpush.msra.mxu0 0.0
    %158 = vmatpush.msra.mxu0 0.0
    %159 = vmatpush.msra.mxu0 0.0
    %160 = vmatpush.msra.mxu0 0.0
    %161 = vmatpush.msra.mxu0 0.0
    %162 = vmatpush.msra.mxu0 0.0
    %163 = vmatpush.msra.mxu0 %v144
    %164 = vmatpush.msra.mxu0 %v79
    %165 = vmatmul.f32.gmra.mxu0 %v140
    %v166 = vpop.f32.mrf.mxu0
    %v167 = vadd.f32 %v116, %v166
    %168 = vdwg.mxu0
    %169 = vmatpush.msra.mxu0 0.0
    %170 = vmatpush.msra.mxu0 0.0
    %171 = vmatpush.msra.mxu0 0.0
    %172 = vmatpush.msra.mxu0 0.0
    %173 = vmatpush.msra.mxu0 0.0
    %174 = vmatpush.msra.mxu0 0.0
    %175 = vmatpush.msra.mxu0 0.0
    %176 = vmatpush.msra.mxu0 0.0
    %177 = vmatpush.msra.mxu0 0.0
    %178 = vmatpush.msra.mxu0 0.0
    %179 = vmatpush.msra.mxu0 0.0
    %180 = vmatpush.msra.mxu0 0.0
    %181 = vmatpush.msra.mxu0 0.0
    %182 = vmatpush.msra.mxu0 0.0
    %183 = vmatpush.msra.mxu0 %v147
    %184 = vmatpush.msra.mxu0 %v80
    %185 = vmatmul.f32.gmra.mxu0 %v140
    %v186 = vpop.f32.mrf.mxu0
    %v187 = vadd.f32 %v136, %v186
    %188 = vdwg.mxu0
    %v189 = vld [vmem:[#allocation5] sm:$0x3]
    %v191 = vperm.slane %v189, 0
    %v192 = vperm.slane %v189, 1
    %v195 = vadd.f32 %v167, %v191
    %v196 = vadd.f32 %v187, %v192
    %v197 = vmax.f32 %v195, 0.0
    %v198 = vmax.f32 %v196, 0.0
    %v199 = vld [vmem:[#allocation7] sm:$0xff]
    %v200 = vld [vmem:[#allocation7 + $0x8] sm:$0xff]
    %v201 = vld [vmem:[#allocation7 + $0x10] sm:$0xff]
    %v202 = vld [vmem:[#allocation7 + $0x18] sm:$0xff]
    %v203 = vld [vmem:[#allocation7 + $0x20] sm:$0xff]
    %v204 = vld [vmem:[#allocation7 + $0x28] sm:$0xff]
    %v205 = vld [vmem:[#allocation7 + $0x30] sm:$0xff]
    %v206 = vld [vmem:[#allocation7 + $0x38] sm:$0xff]
    %v207 = vld [vmem:[#allocation7 + $0x40] sm:$0xff]
    %v208 = vld [vmem:[#allocation7 + $0x48] sm:$0xff]
    %v209 = vld [vmem:[#allocation7 + $0x50] sm:$0xff]
    %v210 = vld [vmem:[#allocation7 + $0x58] sm:$0xff]
    %v211 = vld [vmem:[#allocation7 + $0x60] sm:$0xff]
    %v212 = vld [vmem:[#allocation7 + $0x68] sm:$0xff]
    %v213 = vld [vmem:[#allocation7 + $0x70] sm:$0xff]
    %v214 = vld [vmem:[#allocation7 + $0x78] sm:$0xff]
    %v215 = vld [vmem:[#allocation7 + $0x80] sm:$0xff]
    %v216 = vld [vmem:[#allocation7 + $0x88] sm:$0xff]
    %v217 = vld [vmem:[#allocation7 + $0x90] sm:$0xff]
    %v218 = vld [vmem:[#allocation7 + $0x98] sm:$0xff]
    %v219 = vld [vmem:[#allocation7 + $0xa0] sm:$0xff]
    %v220 = vld [vmem:[#allocation7 + $0xa8] sm:$0xff]
    %v221 = vld [vmem:[#allocation7 + $0xb0] sm:$0xff]
    %v222 = vld [vmem:[#allocation7 + $0xb8] sm:$0xff]
    %v223 = vld [vmem:[#allocation7 + $0xc0] sm:$0xff]
    %v224 = vld [vmem:[#allocation7 + $0xc8] sm:$0xff]
    %v225 = vld [vmem:[#allocation7 + $0xd0] sm:$0xff]
    %v226 = vld [vmem:[#allocation7 + $0xd8] sm:$0xff]
    %v227 = vld [vmem:[#allocation7 + $0xe0] sm:$0xff]
    %v228 = vld [vmem:[#allocation7 + $0xe8] sm:$0xff]
    %v229 = vld [vmem:[#allocation7 + $0xf0] sm:$0xff]
    %v230 = vld [vmem:[#allocation7 + $0xf8] sm:$0xff]
    %v231 = vld [vmem:[#allocation7 + $0x100] sm:$0xff]
    %v232 = vld [vmem:[#allocation7 + $0x108] sm:$0xff]
    %v233 = vld [vmem:[#allocation7 + $0x110] sm:$0xff]
    %v234 = vld [vmem:[#allocation7 + $0x118] sm:$0xff]
    %v235 = vld [vmem:[#allocation7 + $0x120] sm:$0xff]
    %v236 = vld [vmem:[#allocation7 + $0x128] sm:$0xff]
    %v237 = vld [vmem:[#allocation7 + $0x130] sm:$0xff]
    %v238 = vld [vmem:[#allocation7 + $0x138] sm:$0xff]
    %v239 = vld [vmem:[#allocation7 + $0x140] sm:$0xff]
    %v240 = vld [vmem:[#allocation7 + $0x148] sm:$0xff]
    %v241 = vld [vmem:[#allocation7 + $0x150] sm:$0xff]
    %v242 = vld [vmem:[#allocation7 + $0x158] sm:$0xff]
    %v243 = vld [vmem:[#allocation7 + $0x160] sm:$0xff]
    %v244 = vld [vmem:[#allocation7 + $0x168] sm:$0xff]
    %v245 = vld [vmem:[#allocation7 + $0x170] sm:$0xff]
    %v246 = vld [vmem:[#allocation7 + $0x178] sm:$0xff]
    %v247 = vld [vmem:[#allocation7 + $0x180] sm:$0xff]
    %v248 = vld [vmem:[#allocation7 + $0x188] sm:$0xff]
    %v249 = vld [vmem:[#allocation7 + $0x190] sm:$0xff]
    %v250 = vld [vmem:[#allocation7 + $0x198] sm:$0xff]
    %v251 = vld [vmem:[#allocation7 + $0x1a0] sm:$0xff]
    %v252 = vld [vmem:[#allocation7 + $0x1a8] sm:$0xff]
    %v253 = vld [vmem:[#allocation7 + $0x1b0] sm:$0xff]
    %v254 = vld [vmem:[#allocation7 + $0x1b8] sm:$0xff]
    %v255 = vld [vmem:[#allocation7 + $0x1c0] sm:$0xff]
    %v256 = vld [vmem:[#allocation7 + $0x1c8] sm:$0xff]
    %v257 = vld [vmem:[#allocation7 + $0x1d0] sm:$0xff]
    %v258 = vld [vmem:[#allocation7 + $0x1d8] sm:$0xff]
    %v259 = vld [vmem:[#allocation7 + $0x1e0] sm:$0xff]
    %v260 = vld [vmem:[#allocation7 + $0x1e8] sm:$0xff]
    %v261 = vld [vmem:[#allocation7 + $0x1f0] sm:$0xff]
    %v262 = vld [vmem:[#allocation7 + $0x1f8] sm:$0xff]
    %v263 = vld [vmem:[%s6] sm:$0x3]
    %v265 = vperm.slane %v263, 0
    %v266 = vperm.slane %v263, 1
    %269 = vmatpush.msra.mxu0 %v229
    %270 = vmatpush.msra.mxu0 %v227
    %271 = vmatpush.msra.mxu0 %v225
    %272 = vmatpush.msra.mxu0 %v223
    %273 = vmatpush.msra.mxu0 %v221
    %274 = vmatpush.msra.mxu0 %v219
    %275 = vmatpush.msra.mxu0 %v217
    %276 = vmatpush.msra.mxu0 %v215
    %277 = vmatpush.msra.mxu0 %v213
    %278 = vmatpush.msra.mxu0 %v211
    %279 = vmatpush.msra.mxu0 %v209
    %280 = vmatpush.msra.mxu0 %v207
    %281 = vmatpush.msra.mxu0 %v205
    %282 = vmatpush.msra.mxu0 %v203
    %283 = vmatpush.msra.mxu0 %v201
    %284 = vmatpush.msra.mxu0 %v199
    %285 = vmatmul.f32.gmra.mxu0 %v197
    %v286 = vpop.f32.mrf.mxu0
    %v287 = vadd.f32 %v265, %v286
    %288 = vdwg.mxu0
    %289 = vmatpush.msra.mxu0 %v261
    %290 = vmatpush.msra.mxu0 %v259
    %291 = vmatpush.msra.mxu0 %v257
    %292 = vmatpush.msra.mxu0 %v255
    %293 = vmatpush.msra.mxu0 %v253
    %294 = vmatpush.msra.mxu0 %v251
    %295 = vmatpush.msra.mxu0 %v249
    %296 = vmatpush.msra.mxu0 %v247
    %297 = vmatpush.msra.mxu0 %v245
    %298 = vmatpush.msra.mxu0 %v243
    %299 = vmatpush.msra.mxu0 %v241
    %300 = vmatpush.msra.mxu0 %v239
    %301 = vmatpush.msra.mxu0 %v237
    %302 = vmatpush.msra.mxu0 %v235
    %303 = vmatpush.msra.mxu0 %v233
    %304 = vmatpush.msra.mxu0 %v231
    %305 = vmatmul.f32.gmra.mxu0 %v198
    %v306 = vpop.f32.mrf.mxu0
    %v307 = vadd.f32 %v287, %v306
    %308 = vdwg.mxu0
    %309 = vmatpush.msra.mxu0 %v230
    %310 = vmatpush.msra.mxu0 %v228
    %311 = vmatpush.msra.mxu0 %v226
    %312 = vmatpush.msra.mxu0 %v224
    %313 = vmatpush.msra.mxu0 %v222
    %314 = vmatpush.msra.mxu0 %v220
    %315 = vmatpush.msra.mxu0 %v218
    %316 = vmatpush.msra.mxu0 %v216
    %317 = vmatpush.msra.mxu0 %v214
    %318 = vmatpush.msra.mxu0 %v212
    %319 = vmatpush.msra.mxu0 %v210
    %320 = vmatpush.msra.mxu0 %v208
    %321 = vmatpush.msra.mxu0 %v206
    %322 = vmatpush.msra.mxu0 %v204
    %323 = vmatpush.msra.mxu0 %v202
    %324 = vmatpush.msra.mxu0 %v200
    %325 = vmatmul.f32.gmra.mxu0 %v197
    %v326 = vpop.f32.mrf.mxu0
    %v327 = vadd.f32 %v266, %v326
    %328 = vdwg.mxu0
    %329 = vmatpush.msra.mxu0 %v262
    %330 = vmatpush.msra.mxu0 %v260
    %331 = vmatpush.msra.mxu0 %v258
    %332 = vmatpush.msra.mxu0 %v256
    %333 = vmatpush.msra.mxu0 %v254
    %334 = vmatpush.msra.mxu0 %v252
    %335 = vmatpush.msra.mxu0 %v250
    %336 = vmatpush.msra.mxu0 %v248
    %337 = vmatpush.msra.mxu0 %v246
    %338 = vmatpush.msra.mxu0 %v244
    %339 = vmatpush.msra.mxu0 %v242
    %340 = vmatpush.msra.mxu0 %v240
    %341 = vmatpush.msra.mxu0 %v238
    %342 = vmatpush.msra.mxu0 %v236
    %343 = vmatpush.msra.mxu0 %v234
    %344 = vmatpush.msra.mxu0 %v232
    %345 = vmatmul.f32.gmra.mxu0 %v198
    %v346 = vpop.f32.mrf.mxu0
    %v347 = vadd.f32 %v327, %v346
    %348 = vdwg.mxu0
    %v349 = vmax.f32 %v307, 0.0
    %v350 = vmax.f32 %v347, 0.0
    %v351 = vld [vmem:[%s7] sm:$0x3]
    %v353 = vperm.slane %v351, 0
    %v354 = vperm.slane %v351, 1
    %v357 = vmul.f32 %v349, %v353
    %v358 = vmul.f32 %v350, %v354
    %v359 = vadd.f32 %v357, %v358
    %360 = vadd.xlane.f32.xlu0 %v359
    %v361 = vpop.xlane.xlu0 %360
    %s362 = sld [smem:[#allocation2]]
    %v363 = vstv %s362
    %v364 = vadd.f32 %v361, %v363
    %vm365 = vcmask 7168
    %366 = vst.msk [vmem:[%s9] sm:$0xff] %vm365, %v364
    // Predicated region
    $region50: #{tpu_custom_call.1} parent=1 // pred_check
      _
    $region51: #{tpu_custom_call.1} parent=1 // pred_check_branch
      %368 = sbr.rel (0) target = $region53
    $region52: #{tpu_custom_call.1} parent=1 // pred_region
      _
    $region53: #{tpu_custom_call.1} parent=1 // pred_fallthru
      _
    // Predicated region
    $region54: #{tpu_custom_call.1} parent=1 // pred_check
      _
    $region55: #{tpu_custom_call.1} parent=1 // pred_check_branch
      %370 = sbr.rel (0) target = $region57
    $region56: #{tpu_custom_call.1} parent=1 // pred_region
      _
    $region57: #{tpu_custom_call.1} parent=1 // pred_fallthru
      _
    %371 = vsyncpa [#allocation4], 1
    %372 = vsyncpa [#allocation6], 1

</llo_original>
